<compile_context>
chip_gen: v7x
topology: tpu7x:2x2x1
jax: 0.10.0
libtpu: 0.0.40
codegen_flags: <defaults>
</compile_context>

<pallas_src>
import jax
import jax.numpy as jnp
from jax.experimental import pallas as pl
from jax.experimental.pallas import tpu as pltpu

# ----------------------------- problem sizes -----------------------------
B = 16        # batch (galaxies) -- whole batch handled in one kernel invocation
NGP = 8       # number of galaxy parameters
NSSP = 32     # number of SSP components (flattened met x age grid)
H = 32        # hidden width of curve / dust-emission MLPs
HPAD = 128    # fused first-layer width: 3*H = 96, zero-padded to 128 lanes
NLAM = 128    # wavelength grid (lam_eval)

IDX_B2T = 1   # helper.lookup['b_to_t']  (stored in [-1, 1], recover -> [0, 1])
IDX_LNORM = 2 # helper.lookup['l_norm']  (stored as log10, recover -> 10**x)
LN10 = 2.302585092994046


def _softplus(x):
    # numerically stable softplus, VPU/EUP friendly
    return jnp.maximum(x, 0.0) + jnp.log1p(jnp.exp(-jnp.abs(x)))


# ----------------------------- Pallas kernel -----------------------------
def sed_kernel(gp_ref, sfh_ref, l_ssp_ref,
               w1_ref, b1_ref, w2_ref, b2_ref,
               wf_ref, bf_ref, unit_ref, out_ref):
    gp = gp_ref[...]            # (B, NGP) f32

    # helper.get_recover(gp, 'b_to_t') and helper.get_recover(gp, 'l_norm')[:, None]
    b2t = (gp[:, IDX_B2T:IDX_B2T + 1] + 1.0) * 0.5            # (B, 1)
    l_norm = jnp.exp(gp[:, IDX_LNORM:IDX_LNORM + 1] * LN10)   # (B, 1) == 10**gp[:, idx]

    # Merged SSP synthesis: single (2B, NSSP) @ (NSSP, NLAM) f32 MXU op, then row split.
    l_cat = jnp.dot(sfh_ref[...], l_ssp_ref[...],
                    preferred_element_type=jnp.float32)        # (2B, NLAM)
    l_disk = l_cat[:B, :]                                      # (B, NLAM)
    l_bulge = l_cat[B:, :]                                     # (B, NLAM)

    # Fused first layer of the three MLPs: ONE lane-dense (B, NGP)@(NGP, 128) bf16 matmul.
    # Lanes [0:32) -> curve_disk hidden, [32:64) -> curve_bulge, [64:96) -> dust_emission,
    # [96:128) -> zero padding (tanh(0) = 0, multiplied by zero weight rows below).
    h_all = jnp.tanh(jnp.dot(gp.astype(jnp.bfloat16), w1_ref[...],
                             preferred_element_type=jnp.float32) + b1_ref[...])  # (B, 128) f32

    # Fused second layer: block-diagonal (128, 384) bf16 weight -> one MXU matmul.
    # Columns [0:128) -> A_lambda disk, [128:256) -> A_lambda bulge, [256:384) -> dust logits.
    z = jnp.dot(h_all.astype(jnp.bfloat16), w2_ref[...],
                preferred_element_type=jnp.float32) + b2_ref[...]                # (B, 384)
    a_d = z[:, 0 * NLAM:1 * NLAM]
    a_b = z[:, 1 * NLAM:2 * NLAM]
    logits = z[:, 2 * NLAM:3 * NLAM]

    # AttenuationCurve: A_lambda >= 0 ; transmission = 10**(-0.4*A) = exp(-0.4*ln10*A)
    neg_k = -0.4 * LN10
    trans_d = jnp.exp(neg_k * _softplus(a_d))                  # (B, NLAM)
    trans_b = jnp.exp(neg_k * _softplus(a_b))                  # (B, NLAM)

    # DustAttenuation: bulge-to-total weighted, attenuated stellar SED
    l_main = (1.0 - b2t) * trans_d * l_disk + b2t * trans_b * l_bulge

    # DustEmission: normalized dust SED (softmax over wavelength) + absorbed fraction
    m = jnp.max(logits, axis=-1, keepdims=True)
    e = jnp.exp(logits - m)
    l_dust = e / jnp.sum(e, axis=-1, keepdims=True)

    # Absorbed-fraction head: full-vreg VPU multiply + lane reduction (wf is zero-padded
    # to 128 lanes so only the dust-emission hidden lanes contribute).
    fr_lin = jnp.sum(h_all * wf_ref[...], axis=-1, keepdims=True) + bf_ref[...]   # (B, 1)
    frac = 1.0 / (1.0 + jnp.exp(-fr_lin))

    # combine + l_norm scaling, then Detector (return_ph=False, return_lum=False):
    # per-wavelength luminosity -> flux-density conversion vector
    out_ref[...] = (l_norm * (l_main + frac * l_dust)) * unit_ref[...]


# ----------------------------- parameter fusion (done once) -----------------------------
def prepare_params(params):
    """Fuse / pad / cast the raw module parameters into the kernel layout (done once)."""
    (l_ssp, w1d, b1d, w2d, b2d, w1b, b1b, w2b, b2b,
     w1e, b1e, w2e, b2e, wf, bf, unit) = params
    bf16 = jnp.bfloat16
    pad1 = HPAD - 3 * H

    # Fused first layer (NGP, 128): [w1_disk | w1_bulge | w1_de | 0]
    w1cat = jnp.concatenate(
        [w1d, w1b, w1e, jnp.zeros((NGP, pad1), jnp.float32)], axis=1).astype(bf16)
    b1cat = jnp.concatenate(
        [b1d, b1b, b1e, jnp.zeros((1, pad1), jnp.float32)], axis=1)               # (1, 128) f32

    # Fused block-diagonal second layer (128, 384).
    w2cat = jnp.zeros((HPAD, 3 * NLAM), jnp.float32)
    w2cat = w2cat.at[0 * H:1 * H, 0 * NLAM:1 * NLAM].set(w2d)
    w2cat = w2cat.at[1 * H:2 * H, 1 * NLAM:2 * NLAM].set(w2b)
    w2cat = w2cat.at[2 * H:3 * H, 2 * NLAM:3 * NLAM].set(w2e)
    w2cat = w2cat.astype(bf16)
    b2cat = jnp.concatenate([b2d, b2b, b2e], axis=1)                              # (1, 384) f32

    # Absorbed-fraction head weight, zero-padded to a full 128-lane row (lanes [64:96) active).
    wf_pad = jnp.zeros((1, HPAD), jnp.float32).at[:, 2 * H:3 * H].set(jnp.transpose(wf))

    return (l_ssp,                      # (NSSP, NLAM) f32 (SSP synthesis stays exact)
            w1cat, b1cat, w2cat, b2cat, wf_pad, bf, unit)


# ----------------------------- wrapper -----------------------------
@jax.jit
def multiwavelength_sed(gp, sfh_disk, sfh_bulge, kparams):
    (l_ssp, w1cat, b1cat, w2cat, b2cat, wf_pad, bf_, unit) = kparams

    # Layout plumbing only: stack the two SFHs along rows so the kernel does a single
    # (2B, NSSP) @ (NSSP, NLAM) SSP matmul.
    sfh_cat = jnp.concatenate([sfh_disk, sfh_bulge], axis=0)   # (2B, NSSP)

    # No grid: single invocation, every operand fully resident in VMEM (~240 KiB total,
    # far under the VMEM limit on v5e/v6e/v7x). No pipeline double-buffering needed.
    vmem = pl.BlockSpec(memory_space=pltpu.MemorySpace.VMEM)

    out = pl.pallas_call(
        sed_kernel,
        out_shape=jax.ShapeDtypeStruct((B, NLAM), jnp.float32),
        in_specs=[vmem] * 10,
        out_specs=vmem,
    )(gp, sfh_cat, l_ssp, w1cat, b1cat, w2cat, b2cat, wf_pad, bf_, unit)
    return jnp.squeeze(out)  # torch.squeeze(...)


# ----------------------------- pure-JAX reference -----------------------------
def reference(gp, sfh_disk, sfh_bulge, params):
    """Reference with the same mixed precision as the kernel (bf16 MLP matmul operands,
    f32 accumulation; SSP synthesis exact in f32)."""
    (l_ssp, w1d, b1d, w2d, b2d, w1b, b1b, w2b, b2b,
     w1e, b1e, w2e, b2e, wf, bf, unit) = params
    bf16 = jnp.bfloat16
    b2t = (gp[:, IDX_B2T:IDX_B2T + 1] + 1.0) * 0.5
    l_norm = 10.0 ** gp[:, IDX_LNORM:IDX_LNORM + 1]
    l_disk = jnp.dot(sfh_disk, l_ssp, preferred_element_type=jnp.float32)
    l_bulge = jnp.dot(sfh_bulge, l_ssp, preferred_element_type=jnp.float32)

    def trans(w1, b1, w2, b2):
        h = jnp.tanh(jnp.dot(gp.astype(bf16), w1.astype(bf16),
                             preferred_element_type=jnp.float32) + b1)
        a = jax.nn.softplus(jnp.dot(h.astype(bf16), w2.astype(bf16),
                                    preferred_element_type=jnp.float32) + b2)
        return 10.0 ** (-0.4 * a)

    l_main = (1.0 - b2t) * trans(w1d, b1d, w2d, b2d) * l_disk \
             + b2t * trans(w1b, b1b, w2b, b2b) * l_bulge
    h_e = jnp.tanh(jnp.dot(gp.astype(bf16), w1e.astype(bf16),
                           preferred_element_type=jnp.float32) + b1e)
    logits = jnp.dot(h_e.astype(bf16), w2e.astype(bf16),
                     preferred_element_type=jnp.float32) + b2e
    l_dust = jax.nn.softmax(logits, axis=-1)
    frac = jax.nn.sigmoid(h_e @ wf + bf)
    l_ret = l_norm * (l_main + frac * l_dust)
    return jnp.squeeze(l_ret * unit)


# ----------------------------- setup -----------------------------
def make_params(key):
    ks = jax.random.split(key, 16)
    s = 0.5
    l_ssp = jax.random.uniform(ks[0], (NSSP, NLAM), jnp.float32, 0.1, 1.0)
    w1d = s * jax.random.normal(ks[1], (NGP, H), jnp.float32)
    b1d = s * jax.random.normal(ks[2], (1, H), jnp.float32)
    w2d = s * jax.random.normal(ks[3], (H, NLAM), jnp.float32)
    b2d = s * jax.random.normal(ks[4], (1, NLAM), jnp.float32)
    w1b = s * jax.random.normal(ks[5], (NGP, H), jnp.float32)
    b1b = s * jax.random.normal(ks[6], (1, H), jnp.float32)
    w2b = s * jax.random.normal(ks[7], (H, NLAM), jnp.float32)
    b2b = s * jax.random.normal(ks[8], (1, NLAM), jnp.float32)
    w1e = s * jax.random.normal(ks[9], (NGP, H), jnp.float32)
    b1e = s * jax.random.normal(ks[10], (1, H), jnp.float32)
    w2e = s * jax.random.normal(ks[11], (H, NLAM), jnp.float32)
    b2e = s * jax.random.normal(ks[12], (1, NLAM), jnp.float32)
    wf = s * jax.random.normal(ks[13], (H, 1), jnp.float32)
    bf = s * jax.random.normal(ks[14], (1, 1), jnp.float32)
    unit = jax.random.uniform(ks[15], (1, NLAM), jnp.float32, 0.5, 2.0)  # detector L_sol -> Jy
    return (l_ssp, w1d, b1d, w2d, b2d, w1b, b1b, w2b, b2b,
            w1e, b1e, w2e, b2e, wf, bf, unit)


if __name__ == "__main__":
    key = jax.random.PRNGKey(0)
    k_gp, k_sd, k_sb, k_p = jax.random.split(key, 4)

    gp = jnp.tanh(jax.random.normal(k_gp, (B, NGP), jnp.float32))          # params in [-1, 1]
    sfh_disk = jax.nn.softmax(jax.random.normal(k_sd, (B, NSSP), jnp.float32), axis=-1)
    sfh_bulge = jax.nn.softmax(jax.random.normal(k_sb, (B, NSSP), jnp.float32), axis=-1)
    params = make_params(k_p)
    kparams = jax.tree_util.tree_map(jax.block_until_ready, prepare_params(params))

    out = multiwavelength_sed(gp, sfh_disk, sfh_bulge, kparams)
    out = jax.block_until_ready(out)

    ref = reference(gp, sfh_disk, sfh_bulge, params)
    assert out.shape == (B, NLAM)
    # bf16 MLP casts are identical in kernel and reference (block-diagonal fusion only adds
    # exact zeros to the f32 accumulators); slack covers ULP-level differences in
    # transcendental lowerings (tanh/exp/softplus) between Mosaic and XLA.
    assert jnp.allclose(out, ref, rtol=2e-3, atol=1e-5), "mismatch vs pure-JAX reference"

    # TODO(synk): photometric path (return_ph=True filter matmul), Regrid interpolation
    # (regrid != 'base') and Selector-based check_bounds are not exercised here.
    print("KERNEL_OK")
</pallas_src>

<mosaic_0001>
module attributes {stable_mosaic.version = 11 : i64} {
  func.func @sed_kernel(%arg0: memref<16x8xf32, #tpu.memory_space<vmem>>, %arg1: memref<32x32xf32, #tpu.memory_space<vmem>>, %arg2: memref<32x128xf32, #tpu.memory_space<vmem>>, %arg3: memref<8x128xbf16, #tpu.memory_space<vmem>>, %arg4: memref<1x128xf32, #tpu.memory_space<vmem>>, %arg5: memref<128x384xbf16, #tpu.memory_space<vmem>>, %arg6: memref<1x384xf32, #tpu.memory_space<vmem>>, %arg7: memref<1x128xf32, #tpu.memory_space<vmem>>, %arg8: memref<1x1xf32, #tpu.memory_space<vmem>>, %arg9: memref<1x128xf32, #tpu.memory_space<vmem>>, %arg10: memref<16x128xf32, #tpu.memory_space<vmem>>) attributes {dimension_semantics = [], scalar_prefetch = 0 : i64, scratch_operands = 0 : i64, tpu.core_type = #tpu.core_type<tc>} {
    %c0 = arith.constant 0 : index
    %c0_0 = arith.constant 0 : index
    %0 = vector.load %arg0[%c0, %c0_0] : memref<16x8xf32, #tpu.memory_space<vmem>>, vector<16x8xf32>
    %1 = vector.extract_strided_slice %0 {offsets = [0, 1], sizes = [16, 1], strides = [1, 1]} : vector<16x8xf32> to vector<16x1xf32>
    %cst = arith.constant 1.000000e+00 : f32
    %2 = vector.broadcast %cst : f32 to vector<16x1xf32>
    %3 = arith.addf %1, %2 : vector<16x1xf32>
    %cst_1 = arith.constant 5.000000e-01 : f32
    %4 = vector.broadcast %cst_1 : f32 to vector<16x1xf32>
    %5 = arith.mulf %3, %4 : vector<16x1xf32>
    %6 = vector.extract_strided_slice %0 {offsets = [0, 2], sizes = [16, 1], strides = [1, 1]} : vector<16x8xf32> to vector<16x1xf32>
    %cst_2 = arith.constant 2.30258512 : f32
    %7 = vector.broadcast %cst_2 : f32 to vector<16x1xf32>
    %8 = arith.mulf %6, %7 : vector<16x1xf32>
    %9 = math.exp %8 : vector<16x1xf32>
    %c0_3 = arith.constant 0 : index
    %c0_4 = arith.constant 0 : index
    %10 = vector.load %arg1[%c0_3, %c0_4] : memref<32x32xf32, #tpu.memory_space<vmem>>, vector<32x32xf32>
    %c0_5 = arith.constant 0 : index
    %c0_6 = arith.constant 0 : index
    %11 = vector.load %arg2[%c0_5, %c0_6] : memref<32x128xf32, #tpu.memory_space<vmem>>, vector<32x128xf32>
    %cst_7 = arith.constant dense<0.000000e+00> : vector<32x128xf32>
    %12 = tpu.matmul %10, %11, %cst_7 {dimension_numbers = #tpu.dot_dimension_numbers<[1], [0], [0], [1], [0, 0, 1, 1], [], []>} : vector<32x32xf32>, vector<32x128xf32>, vector<32x128xf32> -> vector<32x128xf32>
    %13 = vector.extract_strided_slice %12 {offsets = [0, 0], sizes = [16, 128], strides = [1, 1]} : vector<32x128xf32> to vector<16x128xf32>
    %14 = vector.extract_strided_slice %12 {offsets = [16, 0], sizes = [16, 128], strides = [1, 1]} : vector<32x128xf32> to vector<16x128xf32>
    %15 = arith.truncf %0 : vector<16x8xf32> to vector<16x8xbf16>
    %c0_8 = arith.constant 0 : index
    %c0_9 = arith.constant 0 : index
    %16 = vector.load %arg3[%c0_8, %c0_9] : memref<8x128xbf16, #tpu.memory_space<vmem>>, vector<8x128xbf16>
    %cst_10 = arith.constant dense<0.000000e+00> : vector<16x128xf32>
    %17 = tpu.matmul %15, %16, %cst_10 {dimension_numbers = #tpu.dot_dimension_numbers<[1], [0], [0], [1], [0, 0, 1, 1], [], []>} : vector<16x8xbf16>, vector<8x128xbf16>, vector<16x128xf32> -> vector<16x128xf32>
    %c0_11 = arith.constant 0 : index
    %c0_12 = arith.constant 0 : index
    %18 = vector.load %arg4[%c0_11, %c0_12] : memref<1x128xf32, #tpu.memory_space<vmem>>, vector<1x128xf32>
    %19 = vector.broadcast %18 : vector<1x128xf32> to vector<16x128xf32>
    %20 = arith.addf %17, %19 : vector<16x128xf32>
    %21 = math.tanh %20 : vector<16x128xf32>
    %22 = arith.truncf %21 : vector<16x128xf32> to vector<16x128xbf16>
    %c0_13 = arith.constant 0 : index
    %c0_14 = arith.constant 0 : index
    %23 = vector.load %arg5[%c0_13, %c0_14] : memref<128x384xbf16, #tpu.memory_space<vmem>>, vector<128x384xbf16>
    %cst_15 = arith.constant dense<0.000000e+00> : vector<16x384xf32>
    %24 = tpu.matmul %22, %23, %cst_15 {dimension_numbers = #tpu.dot_dimension_numbers<[1], [0], [0], [1], [0, 0, 1, 1], [], []>} : vector<16x128xbf16>, vector<128x384xbf16>, vector<16x384xf32> -> vector<16x384xf32>
    %c0_16 = arith.constant 0 : index
    %c0_17 = arith.constant 0 : index
    %25 = vector.load %arg6[%c0_16, %c0_17] : memref<1x384xf32, #tpu.memory_space<vmem>>, vector<1x384xf32>
    %26 = vector.broadcast %25 : vector<1x384xf32> to vector<16x384xf32>
    %27 = arith.addf %24, %26 : vector<16x384xf32>
    %28 = vector.extract_strided_slice %27 {offsets = [0, 0], sizes = [16, 128], strides = [1, 1]} : vector<16x384xf32> to vector<16x128xf32>
    %29 = vector.extract_strided_slice %27 {offsets = [0, 128], sizes = [16, 128], strides = [1, 1]} : vector<16x384xf32> to vector<16x128xf32>
    %30 = vector.extract_strided_slice %27 {offsets = [0, 256], sizes = [16, 128], strides = [1, 1]} : vector<16x384xf32> to vector<16x128xf32>
    %cst_18 = arith.constant 0.000000e+00 : f32
    %31 = vector.broadcast %cst_18 : f32 to vector<16x128xf32>
    %32 = arith.maximumf %28, %31 : vector<16x128xf32>
    %33 = math.absf %28 : vector<16x128xf32>
    %cst_19 = arith.constant 0.000000e+00 : f32
    %34 = vector.broadcast %cst_19 : f32 to vector<16x128xf32>
    %35 = arith.subf %34, %33 : vector<16x128xf32>
    %36 = math.exp %35 : vector<16x128xf32>
    %37 = math.log1p %36 : vector<16x128xf32>
    %38 = arith.addf %32, %37 : vector<16x128xf32>
    %cst_20 = arith.constant -0.921034038 : f32
    %39 = vector.broadcast %cst_20 : f32 to vector<16x128xf32>
    %40 = arith.mulf %39, %38 : vector<16x128xf32>
    %41 = math.exp %40 : vector<16x128xf32>
    %cst_21 = arith.constant 0.000000e+00 : f32
    %42 = vector.broadcast %cst_21 : f32 to vector<16x128xf32>
    %43 = arith.maximumf %29, %42 : vector<16x128xf32>
    %44 = math.absf %29 : vector<16x128xf32>
    %cst_22 = arith.constant 0.000000e+00 : f32
    %45 = vector.broadcast %cst_22 : f32 to vector<16x128xf32>
    %46 = arith.subf %45, %44 : vector<16x128xf32>
    %47 = math.exp %46 : vector<16x128xf32>
    %48 = math.log1p %47 : vector<16x128xf32>
    %49 = arith.addf %43, %48 : vector<16x128xf32>
    %cst_23 = arith.constant -0.921034038 : f32
    %50 = vector.broadcast %cst_23 : f32 to vector<16x128xf32>
    %51 = arith.mulf %50, %49 : vector<16x128xf32>
    %52 = math.exp %51 : vector<16x128xf32>
    %cst_24 = arith.constant 1.000000e+00 : f32
    %53 = vector.broadcast %cst_24 : f32 to vector<16x1xf32>
    %54 = arith.subf %53, %5 : vector<16x1xf32>
    %55 = vector.broadcast %54 : vector<16x1xf32> to vector<16x128xf32>
    %56 = arith.mulf %55, %41 : vector<16x128xf32>
    %57 = arith.mulf %56, %13 : vector<16x128xf32>
    %58 = vector.broadcast %5 : vector<16x1xf32> to vector<16x128xf32>
    %59 = arith.mulf %58, %52 : vector<16x128xf32>
    %60 = arith.mulf %59, %14 : vector<16x128xf32>
    %61 = arith.addf %57, %60 : vector<16x128xf32>
    %cst_25 = arith.constant dense<0xFF800000> : vector<16xf32>
    %62 = vector.multi_reduction <maximumf>, %30, %cst_25 [1] : vector<16x128xf32> to vector<16xf32>
    %63 = vector.shape_cast %62 : vector<16xf32> to vector<16x1xf32>
    %64 = vector.broadcast %63 : vector<16x1xf32> to vector<16x128xf32>
    %65 = arith.subf %30, %64 : vector<16x128xf32>
    %66 = math.exp %65 : vector<16x128xf32>
    %cst_26 = arith.constant dense<0.000000e+00> : vector<16xf32>
    %67 = vector.multi_reduction <add>, %66, %cst_26 [1] : vector<16x128xf32> to vector<16xf32>
    %68 = vector.shape_cast %67 : vector<16xf32> to vector<16x1xf32>
    %69 = vector.broadcast %68 : vector<16x1xf32> to vector<16x128xf32>
    %70 = arith.divf %66, %69 : vector<16x128xf32>
    %c0_27 = arith.constant 0 : index
    %c0_28 = arith.constant 0 : index
    %71 = vector.load %arg7[%c0_27, %c0_28] : memref<1x128xf32, #tpu.memory_space<vmem>>, vector<1x128xf32>
    %72 = vector.broadcast %71 : vector<1x128xf32> to vector<16x128xf32>
    %73 = arith.mulf %21, %72 : vector<16x128xf32>
    %cst_29 = arith.constant dense<0.000000e+00> : vector<16xf32>
    %74 = vector.multi_reduction <add>, %73, %cst_29 [1] : vector<16x128xf32> to vector<16xf32>
    %75 = vector.shape_cast %74 : vector<16xf32> to vector<16x1xf32>
    %c0_30 = arith.constant 0 : index
    %c0_31 = arith.constant 0 : index
    %76 = vector.load %arg8[%c0_30, %c0_31] : memref<1x1xf32, #tpu.memory_space<vmem>>, vector<1x1xf32>
    %77 = vector.broadcast %76 : vector<1x1xf32> to vector<16x1xf32>
    %78 = arith.addf %75, %77 : vector<16x1xf32>
    %cst_32 = arith.constant 0.000000e+00 : f32
    %79 = vector.broadcast %cst_32 : f32 to vector<16x1xf32>
    %80 = arith.subf %79, %78 : vector<16x1xf32>
    %81 = math.exp %80 : vector<16x1xf32>
    %cst_33 = arith.constant 1.000000e+00 : f32
    %82 = vector.broadcast %cst_33 : f32 to vector<16x1xf32>
    %83 = arith.addf %82, %81 : vector<16x1xf32>
    %cst_34 = arith.constant 1.000000e+00 : f32
    %84 = vector.broadcast %cst_34 : f32 to vector<16x1xf32>
    %85 = arith.divf %84, %83 : vector<16x1xf32>
    %86 = vector.broadcast %85 : vector<16x1xf32> to vector<16x128xf32>
    %87 = arith.mulf %86, %70 : vector<16x128xf32>
    %88 = arith.addf %61, %87 : vector<16x128xf32>
    %89 = vector.broadcast %9 : vector<16x1xf32> to vector<16x128xf32>
    %90 = arith.mulf %89, %88 : vector<16x128xf32>
    %c0_35 = arith.constant 0 : index
    %c0_36 = arith.constant 0 : index
    %91 = vector.load %arg9[%c0_35, %c0_36] : memref<1x128xf32, #tpu.memory_space<vmem>>, vector<1x128xf32>
    %92 = vector.broadcast %91 : vector<1x128xf32> to vector<16x128xf32>
    %93 = arith.mulf %90, %92 : vector<16x128xf32>
    %c0_37 = arith.constant 0 : index
    %c0_38 = arith.constant 0 : index
    %94 = vector.load %arg10[%c0_37, %c0_38] : memref<16x128xf32, #tpu.memory_space<vmem>>, vector<16x128xf32>
    tpu.vector_store %arg10[%c0_37, %c0_38], %93 {strides = array<i32>} : memref<16x128xf32, #tpu.memory_space<vmem>>, vector<16x128xf32>,
    return
  }
}

</mosaic_0001>

<llo_original>
// kernel: multiwavelength_sed.1
$region0: #{multiwavelength_sed.1}
  #allocation0 [shape = 'u32[]', space=smem, size = 0x4, offset = 0x4, fixed_abs, tag = 'smem constant byte address 0x4 - core index']
  #allocation1 [shape = 'u32[144,128]{1,0:T(1,128)}', space=vmem, size = 0x12000, scoped, tag = 'internal scratch']
  #allocation2 [shape = 'f32[1,1]{1,0:T(1,128)S(1)}', space=vmem, size = 0x200, scoped, tag = 'scoped memory for multiwavelength_sed.1']
  %s0 = inlined_call_operand.vmem [shape: f32[16,8], index: 0, kind: input, shape index: {}]
  %s1 = inlined_call_operand.vmem [shape: f32[32,32], index: 1, kind: input, shape index: {}]
  %s2 = inlined_call_operand.vmem [shape: f32[32,128], index: 2, kind: input, shape index: {}]
  %s3 = inlined_call_operand.vmem [shape: bf16[8,128], index: 3, kind: input, shape index: {}]
  %s4 = inlined_call_operand.vmem [shape: f32[1,128], index: 4, kind: input, shape index: {}]
  %s5 = inlined_call_operand.hbm [shape: bf16[128,384], index: 5, kind: input, shape index: {}]
  %s6 = inlined_call_operand.vmem [shape: f32[1,384], index: 6, kind: input, shape index: {}]
  %s7 = inlined_call_operand.vmem [shape: f32[1,128], index: 7, kind: input, shape index: {}]
  %s8 = inlined_call_operand.<no memory space> [shape: f32[1,1], index: 8, kind: input, shape index: {}]
  %s9 = inlined_call_operand.vmem [shape: f32[1,128], index: 9, kind: input, shape index: {}]
  %s10 = inlined_call_operand.hbm [shape: f32[16,128], index: 10, kind: output, shape index: {}]
  %s11 = sld [smem:[#allocation0]]
  $region54: #{multiwavelength_sed.1} parent=0
    _
  %s13 = ssub.s32 1, %s11
  %s14 = scalar_select 0, %s13, %s11
  %v15 = vstv %s8
  %16 = vst [vmem:[#allocation2] sm:$0x1] %v15
  $region1: #{multiwavelength_sed.1} parent=0
    #allocation3 [shape = 'u8[98304]{0}', space=vmem, size = 0x18000, scoped, tag = 'input window, operand 5, single buffered']
    #allocation4 [shape = 's32[1]{0}', space=sflag, size = 0x4, scoped, tag = 'scoped memory for multiwavelength_sed.1']
    #allocation5 [shape = 's32[1]{0}', space=sflag, size = 0x4, scoped, tag = 'scoped memory for multiwavelength_sed.1']
    #allocation6 [shape = 'u8[8192]{0}', space=vmem, size = 0x2000, scoped, tag = 'output window, operand 0, single buffered']
    %17 = vsyncpa [#allocation4], 0
    %18 = vsyncpa [#allocation5], 0
    // Predicated region
    $region2: #{multiwavelength_sed.1} parent=1 // pred_check
      _
    $region3: #{multiwavelength_sed.1} parent=1 // pred_check_branch
      %20 = sbr.rel (0) target = $region5
    $region4: #{multiwavelength_sed.1} parent=1 // pred_region
      _
    $region5: #{multiwavelength_sed.1} parent=1 // pred_fallthru
      _
    // Predicated region
    $region6: #{multiwavelength_sed.1} parent=1 // pred_check
      _
    $region7: #{multiwavelength_sed.1} parent=1 // pred_check_branch
      %22 = sbr.rel (0) target = $region9
    $region8: #{multiwavelength_sed.1} parent=1 // pred_region
      _
    $region9: #{multiwavelength_sed.1} parent=1 // pred_fallthru
      _
    // Predicated region
    $region10: #{multiwavelength_sed.1} parent=1 // pred_check
      _
    $region11: #{multiwavelength_sed.1} parent=1 // pred_check_branch
      %24 = sbr.rel (0) target = $region13
    $region12: #{multiwavelength_sed.1} parent=1 // pred_region
      _
    $region13: #{multiwavelength_sed.1} parent=1 // pred_fallthru
      _
    // Predicated region
    $region14: #{multiwavelength_sed.1} parent=1 // pred_check
      _
    $region15: #{multiwavelength_sed.1} parent=1 // pred_check_branch
      %26 = sbr.rel (0) target = $region17
    $region16: #{multiwavelength_sed.1} parent=1 // pred_region
      _
    $region17: #{multiwavelength_sed.1} parent=1 // pred_fallthru
      _
    // Predicated region
    $region18: #{multiwavelength_sed.1} parent=1 // pred_check
      _
    $region19: #{multiwavelength_sed.1} parent=1 // pred_check_branch
      %28 = sbr.rel (0) target = $region21
    $region20: #{multiwavelength_sed.1} parent=1 // pred_region
      _
    $region21: #{multiwavelength_sed.1} parent=1 // pred_fallthru
      _
    // Predicated region
    $region22: #{multiwavelength_sed.1} parent=1 // pred_check
      _
    $region23: #{multiwavelength_sed.1} parent=1 // pred_check_branch
      %30 = sbr.rel (0) target = $region25
    $region24: #{multiwavelength_sed.1} parent=1 // pred_region
      %s32 = ssub.s32 3072, 3072
      %33 = vsyncadd [#allocation4], %s32
      %s34 = sshll.u32 [#allocation3], 4
      %s35 = int_to_ptr.vmem [resolvable:$true] %s34
      %40 = dma.hbm_to_vmem [thread:$0]  %s5, 3072, %s35, [#allocation4], 192, 192, 12
    $region25: #{multiwavelength_sed.1} parent=1 // pred_fallthru
      _
    // Predicated region
    $region26: #{multiwavelength_sed.1} parent=1 // pred_check
      _
    $region27: #{multiwavelength_sed.1} parent=1 // pred_check_branch
      %42 = sbr.rel (0) target = $region29
    $region28: #{multiwavelength_sed.1} parent=1 // pred_region
      _
    $region29: #{multiwavelength_sed.1} parent=1 // pred_fallthru
      _
    // Predicated region
    $region30: #{multiwavelength_sed.1} parent=1 // pred_check
      _
    $region31: #{multiwavelength_sed.1} parent=1 // pred_check_branch
      %44 = sbr.rel (0) target = $region33
    $region32: #{multiwavelength_sed.1} parent=1 // pred_region
      _
    $region33: #{multiwavelength_sed.1} parent=1 // pred_fallthru
      _
    // Predicated region
    $region34: #{multiwavelength_sed.1} parent=1 // pred_check
      _
    $region35: #{multiwavelength_sed.1} parent=1 // pred_check_branch
      %46 = sbr.rel (0) target = $region37
    $region36: #{multiwavelength_sed.1} parent=1 // pred_region
      _
    $region37: #{multiwavelength_sed.1} parent=1 // pred_fallthru
      _
    // Predicated region
    $region38: #{multiwavelength_sed.1} parent=1 // pred_check
      _
    $region39: #{multiwavelength_sed.1} parent=1 // pred_check_branch
      %48 = sbr.rel (0) target = $region41
    $region40: #{multiwavelength_sed.1} parent=1 // pred_region
      _
    $region41: #{multiwavelength_sed.1} parent=1 // pred_fallthru
      _
    // Predicated region
    $region42: #{multiwavelength_sed.1} parent=1 // pred_check
      _
    $region43: #{multiwavelength_sed.1} parent=1 // pred_check_branch
      %50 = sbr.rel (0) target = $region45
    $region44: #{multiwavelength_sed.1} parent=1 // pred_region
      %51 = dma.done [#allocation4], 3072
    $region45: #{multiwavelength_sed.1} parent=1 // pred_fallthru
      _
    %v53 = vld [vmem:[%s0] sm:$0xff]
    %v54 = vld [vmem:[%s0 + $0x8] sm:$0xff]
    %v55 = vadd.f32 %v53, 1.0
    %v56 = vadd.f32 %v54, 1.0
    %v57 = vmul.f32 %v55, 0.5
    %v58 = vmul.f32 %v56, 0.5
    %v59 = vmul.f32 %v53, 2.3025851
    %v60 = vmul.f32 %v54, 2.3025851
    %v61 = vmul.f32 %v59, 1.442695
    %v62 = vpow.pop %v61
    %v63 = vmul.f32 %v60, 1.442695
    %v64 = vpow.pop %v63
    %v65 = vld [vmem:[%s1] sm:$0xff]
    %v66 = vld [vmem:[%s1 + $0x8] sm:$0xff]
    %v67 = vld [vmem:[%s1 + $0x10] sm:$0xff]
    %v68 = vld [vmem:[%s1 + $0x18] sm:$0xff]
    %v69 = vld [vmem:[%s2] sm:$0xff]
    %v70 = vld [vmem:[%s2 + $0x8] sm:$0xff]
    %v71 = vld [vmem:[%s2 + $0x10] sm:$0xff]
    %v72 = vld [vmem:[%s2 + $0x18] sm:$0xff]
    %vm73 = vcmask 261120
    %v75 = vsel %vm73, %v65, 0
    %v78 = vsel %vm73, %v66, 0
    %v81 = vsel %vm73, %v67, 0
    %v84 = vsel %vm73, %v68, 0
    %86 = vmatprep.subr.mxu0 0.0
    %87 = vmatpush1.msra.mxu0 %v69
    %88 = vmatprep.subr.mxu0 0.0
    %89 = vmatpush1.msra.mxu0 %v70
    %90 = vmatprep.subr.mxu0 0.0
    %91 = vmatpush1.msra.mxu0 %v71
    %92 = vmatprep.subr.mxu0 0.0
    %93 = vmatpush1.msra.mxu0 %v72
    %94 = vmatprep.subr.mxu0 0.0
    %95 = vmatpush1.msra.mxu0 0.0
    %96 = vmatprep.subr.mxu0 0.0
    %97 = vmatpush1.msra.mxu0 0.0
    %98 = vmatprep.subr.mxu0 0.0
    %99 = vmatpush1.msra.mxu0 0.0
    %100 = vmatprep.subr.mxu0 0.0
    %101 = vmatpush1.msra.mxu0 0.0
    %102 = vmatprep.subr.mxu0 0.0
    %103 = vmatpush1.msra.mxu0 0.0
    %104 = vmatprep.subr.mxu0 0.0
    %105 = vmatpush1.msra.mxu0 0.0
    %106 = vmatprep.subr.mxu0 0.0
    %107 = vmatpush1.msra.mxu0 0.0
    %108 = vmatprep.subr.mxu0 0.0
    %109 = vmatpush1.msra.mxu0 0.0
    %110 = vmatprep.subr.mxu0 0.0
    %111 = vmatpush1.msra.mxu0 0.0
    %112 = vmatprep.subr.mxu0 0.0
    %113 = vmatpush1.msra.mxu0 0.0
    %114 = vmatprep.subr.mxu0 0.0
    %115 = vmatpush1.msra.mxu0 0.0
    %116 = vmatprep.subr.mxu0 0.0
    %117 = vmatpush1.msra.mxu0 0.0
    %118 = vmatprep.subr.mxu0 0.0
    %119 = vmatpush1.msra.mxu0 0.0
    %120 = vmatprep.subr.mxu0 0.0
    %121 = vmatpush1.msra.mxu0 0.0
    %122 = vmatprep.subr.mxu0 0.0
    %123 = vmatpush1.msra.mxu0 0.0
    %124 = vmatprep.subr.mxu0 0.0
    %125 = vmatpush1.msra.mxu0 0.0
    %126 = vmatprep.subr.mxu0 0.0
    %127 = vmatpush1.msra.mxu0 0.0
    %128 = vmatprep.subr.mxu0 0.0
    %129 = vmatpush1.msra.mxu0 0.0
    %130 = vmatprep.subr.mxu0 0.0
    %131 = vmatpush1.msra.mxu0 0.0
    %132 = vmatprep.subr.mxu0 0.0
    %133 = vmatpush1.msra.mxu0 0.0
    %134 = vmatprep.subr.mxu0 0.0
    %135 = vmatpush1.msra.mxu0 0.0
    %136 = vmatprep.subr.mxu0 0.0
    %137 = vmatpush1.msra.mxu0 0.0
    %138 = vmatprep.subr.mxu0 0.0
    %139 = vmatpush1.msra.mxu0 0.0
    %140 = vmatprep.subr.mxu0 0.0
    %141 = vmatpush1.msra.mxu0 0.0
    %142 = vmatprep.subr.mxu0 0.0
    %143 = vmatpush1.msra.mxu0 0.0
    %144 = vmatprep.subr.mxu0 0.0
    %145 = vmatpush1.msra.mxu0 0.0
    %146 = vmatprep.subr.mxu0 0.0
    %147 = vmatpush1.msra.mxu0 0.0
    %148 = vmatprep.subr.mxu0 0.0
    %149 = vmatpush1.msra.mxu0 0.0
    %150 = vmatprep.mubr.f32.mxu0 0.0
    %151 = vmatmul.mubr.f32.gmra.mrb[0].mxu0 %v75
    %v152 = vpop.f32.mrb[0].mxu0
    %v153 = vadd.f32 0.0, %v152
    %v154 = vpop.f32.mrb[0].mxu0
    %155 = vmatprep.mubr.f32.mxu0 0.0
    %156 = vmatmul.mubr.f32.gmra.mrb[0].mxu0 %v78
    %v157 = vpop.f32.mrb[0].mxu0
    %v158 = vadd.f32 0.0, %v157
    %v159 = vpop.f32.mrb[0].mxu0
    %160 = vmatprep.mubr.f32.mxu0 0.0
    %161 = vmatmul.mubr.f32.gmra.mrb[0].mxu0 %v81
    %v162 = vpop.f32.mrb[0].mxu0
    %v163 = vadd.f32 0.0, %v162
    %v164 = vpop.f32.mrb[0].mxu0
    %165 = vmatprep.mubr.f32.mxu0 0.0
    %166 = vmatmul.mubr.f32.gmra.mrb[0].mxu0 %v84
    %v167 = vpop.f32.mrb[0].mxu0
    %v168 = vadd.f32 0.0, %v167
    %v169 = vpop.f32.mrb[0].mxu0
    %170 = vdwg.mxu0
    %v171 = vpack.c.bf16 %v54, %v53
    %v172 = vld [vmem:[%s3] sm:$0xf]
    %v173 = vld [vmem:[%s4] sm:$0x1]
    %v175 = vlaneseq
    %v176 = vshrl.u32 %v175, 7
    %v177 = vsub.s32 0, %v176
    %v178 = vrot.slane %v173, %v177
    %vm180 = vcmask 64512
    %v182 = vsel %vm180, %v171, 0
    %vm184 = vcmask 1043456
    %v186 = vsel %vm184, %v172, 0
    %188 = vmatprep.subr.bf16.mxu0 0
    %189 = vmatpush1.bf16.msra.mxu0 %v186
    %190 = vmatprep.subr.bf16.mxu0 0
    %191 = vmatpush1.bf16.msra.mxu0 0
    %192 = vmatprep.subr.bf16.mxu0 0
    %193 = vmatpush1.bf16.msra.mxu0 0
    %194 = vmatprep.subr.bf16.mxu0 0
    %195 = vmatpush1.bf16.msra.mxu0 0
    %196 = vmatprep.subr.bf16.mxu0 0
    %197 = vmatpush1.bf16.msra.mxu0 0
    %198 = vmatprep.subr.bf16.mxu0 0
    %199 = vmatpush1.bf16.msra.mxu0 0
    %200 = vmatprep.subr.bf16.mxu0 0
    %201 = vmatpush1.bf16.msra.mxu0 0
    %202 = vmatprep.subr.bf16.mxu0 0
    %203 = vmatpush1.bf16.msra.mxu0 0
    %204 = vmatprep.subr.bf16.mxu0 0
    %205 = vmatpush1.bf16.msra.mxu0 0
    %206 = vmatprep.subr.bf16.mxu0 0
    %207 = vmatpush1.bf16.msra.mxu0 0
    %208 = vmatprep.subr.bf16.mxu0 0
    %209 = vmatpush1.bf16.msra.mxu0 0
    %210 = vmatprep.subr.bf16.mxu0 0
    %211 = vmatpush1.bf16.msra.mxu0 0
    %212 = vmatprep.subr.bf16.mxu0 0
    %213 = vmatpush1.bf16.msra.mxu0 0
    %214 = vmatprep.subr.bf16.mxu0 0
    %215 = vmatpush1.bf16.msra.mxu0 0
    %216 = vmatprep.subr.bf16.mxu0 0
    %217 = vmatpush1.bf16.msra.mxu0 0
    %218 = vmatprep.subr.bf16.mxu0 0
    %219 = vmatpush1.bf16.msra.mxu0 0
    %220 = vmatprep.mubr.bf16.mxu0 0
    %221 = vmatmul.mubr.bf16.gmra.mrb[0].mxu0 %v182
    %v222 = vpop.f32.mrb[0].mxu0
    %v223 = vadd.f32 %v178, %v222
    %v224 = vpop.f32.mrb[0].mxu0
    %v225 = vpop.f32.mrb[0].mxu0
    %v226 = vadd.f32 %v178, %v225
    %v227 = vpop.f32.mrb[0].mxu0
    %228 = vdwg.mxu0
    %v229 = vtanh.pop %v223
    %v230 = vtanh.pop %v226
    %v231 = vpack.c.bf16 %v230, %v229
    %v232 = vld [vmem:[#allocation3] sm:$0xff]
    %v233 = vld [vmem:[#allocation3 + $0x8] sm:$0xf]
    %v234 = vld [vmem:[#allocation3 + $0xc] sm:$0xff]
    %v235 = vld [vmem:[#allocation3 + $0x14] sm:$0xf]
    %v236 = vld [vmem:[#allocation3 + $0x18] sm:$0xff]
    %v237 = vld [vmem:[#allocation3 + $0x20] sm:$0xf]
    %v238 = vld [vmem:[#allocation3 + $0x24] sm:$0xff]
    %v239 = vld [vmem:[#allocation3 + $0x2c] sm:$0xf]
    %v240 = vld [vmem:[#allocation3 + $0x30] sm:$0xff]
    %v241 = vld [vmem:[#allocation3 + $0x38] sm:$0xf]
    %v242 = vld [vmem:[#allocation3 + $0x3c] sm:$0xff]
    %v243 = vld [vmem:[#allocation3 + $0x44] sm:$0xf]
    %v244 = vld [vmem:[#allocation3 + $0x48] sm:$0xff]
    %v245 = vld [vmem:[#allocation3 + $0x50] sm:$0xf]
    %v246 = vld [vmem:[#allocation3 + $0x54] sm:$0xff]
    %v247 = vld [vmem:[#allocation3 + $0x5c] sm:$0xf]
    %v248 = vld [vmem:[#allocation3 + $0x60] sm:$0xff]
    %v249 = vld [vmem:[#allocation3 + $0x68] sm:$0xf]
    %v250 = vld [vmem:[#allocation3 + $0x6c] sm:$0xff]
    %v251 = vld [vmem:[#allocation3 + $0x74] sm:$0xf]
    %v252 = vld [vmem:[#allocation3 + $0x78] sm:$0xff]
    %v253 = vld [vmem:[#allocation3 + $0x80] sm:$0xf]
    %v254 = vld [vmem:[#allocation3 + $0x84] sm:$0xff]
    %v255 = vld [vmem:[#allocation3 + $0x8c] sm:$0xf]
    %v256 = vld [vmem:[#allocation3 + $0x90] sm:$0xff]
    %v257 = vld [vmem:[#allocation3 + $0x98] sm:$0xf]
    %v258 = vld [vmem:[#allocation3 + $0x9c] sm:$0xff]
    %v259 = vld [vmem:[#allocation3 + $0xa4] sm:$0xf]
    %v260 = vld [vmem:[#allocation3 + $0xa8] sm:$0xff]
    %v261 = vld [vmem:[#allocation3 + $0xb0] sm:$0xf]
    %v262 = vld [vmem:[#allocation3 + $0xb4] sm:$0xff]
    %v263 = vld [vmem:[#allocation3 + $0xbc] sm:$0xf]
    %v264 = vld [vmem:[%s6] sm:$0x7]
    %v266 = vlaneseq
    %v267 = vshrl.u32 %v266, 7
    %v268 = vsub.s32 0, %v267
    %v269 = vrot.slane %v264, %v268
    %v270 = vlaneseq
    %v271 = vshrl.u32 %v270, 7
    %v272 = vsub.s32 1, %v271
    %v273 = vrot.slane %v264, %v272
    %v274 = vlaneseq
    %v275 = vshrl.u32 %v274, 7
    %v276 = vsub.s32 2, %v275
    %v277 = vrot.slane %v264, %v276
    %v313 = vunpack.c.l.b16 %v232
    %v314 = vunpack.c.h.b16 %v232
    %v315 = vunpack.c.l.b16 %v233
    %v316 = vunpack.c.l.b16 %v234
    %v317 = vunpack.c.h.b16 %v234
    %v318 = vunpack.c.l.b16 %v235
    %v319 = vunpack.c.l.b16 %v236
    %v320 = vunpack.c.h.b16 %v236
    %v321 = vunpack.c.l.b16 %v237
    %v322 = vunpack.c.l.b16 %v238
    %v323 = vunpack.c.h.b16 %v238
    %v324 = vunpack.c.l.b16 %v239
    %v325 = vunpack.c.l.b16 %v240
    %v326 = vunpack.c.h.b16 %v240
    %v327 = vunpack.c.l.b16 %v241
    %v328 = vunpack.c.l.b16 %v242
    %v329 = vunpack.c.h.b16 %v242
    %v330 = vunpack.c.l.b16 %v243
    %v331 = vunpack.c.l.b16 %v244
    %v332 = vunpack.c.h.b16 %v244
    %v333 = vunpack.c.l.b16 %v245
    %v334 = vunpack.c.l.b16 %v246
    %v335 = vunpack.c.h.b16 %v246
    %v336 = vunpack.c.l.b16 %v247
    %v337 = vunpack.c.l.b16 %v248
    %v338 = vunpack.c.h.b16 %v248
    %v339 = vunpack.c.l.b16 %v249
    %v340 = vunpack.c.l.b16 %v250
    %v341 = vunpack.c.h.b16 %v250
    %v342 = vunpack.c.l.b16 %v251
    %v343 = vunpack.c.l.b16 %v252
    %v344 = vunpack.c.h.b16 %v252
    %v345 = vunpack.c.l.b16 %v253
    %v346 = vunpack.c.l.b16 %v254
    %v347 = vunpack.c.h.b16 %v254
    %v348 = vunpack.c.l.b16 %v255
    %v349 = vunpack.c.l.b16 %v256
    %v350 = vunpack.c.h.b16 %v256
    %v351 = vunpack.c.l.b16 %v257
    %v352 = vunpack.c.l.b16 %v258
    %v353 = vunpack.c.h.b16 %v258
    %v354 = vunpack.c.l.b16 %v259
    %v355 = vunpack.c.l.b16 %v260
    %v356 = vunpack.c.h.b16 %v260
    %v357 = vunpack.c.l.b16 %v261
    %v358 = vunpack.c.l.b16 %v262
    %v359 = vunpack.c.h.b16 %v262
    %v360 = vunpack.c.l.b16 %v263
    %v361 = vpack.c.b16 %v316, %v313
    %v362 = vpack.c.b16 %v317, %v314
    %v363 = vpack.c.b16 %v318, %v315
    %v364 = vpack.c.b16 %v322, %v319
    %v365 = vpack.c.b16 %v323, %v320
    %v366 = vpack.c.b16 %v324, %v321
    %v367 = vpack.c.b16 %v328, %v325
    %v368 = vpack.c.b16 %v329, %v326
    %v369 = vpack.c.b16 %v330, %v327
    %v370 = vpack.c.b16 %v334, %v331
    %v371 = vpack.c.b16 %v335, %v332
    %v372 = vpack.c.b16 %v336, %v333
    %v373 = vpack.c.b16 %v340, %v337
    %v374 = vpack.c.b16 %v341, %v338
    %v375 = vpack.c.b16 %v342, %v339
    %v376 = vpack.c.b16 %v346, %v343
    %v377 = vpack.c.b16 %v347, %v344
    %v378 = vpack.c.b16 %v348, %v345
    %v379 = vpack.c.b16 %v352, %v349
    %v380 = vpack.c.b16 %v353, %v350
    %v381 = vpack.c.b16 %v354, %v351
    %v382 = vpack.c.b16 %v358, %v355
    %v383 = vpack.c.b16 %v359, %v356
    %v384 = vpack.c.b16 %v360, %v357
    %409 = vmatprep.subr.bf16.mxu0 %v362
    %410 = vmatpush1.bf16.msra.mxu0 %v361
    %411 = vmatprep.subr.bf16.mxu0 %v365
    %412 = vmatpush1.bf16.msra.mxu0 %v364
    %413 = vmatprep.subr.bf16.mxu0 %v368
    %414 = vmatpush1.bf16.msra.mxu0 %v367
    %415 = vmatprep.subr.bf16.mxu0 %v371
    %416 = vmatpush1.bf16.msra.mxu0 %v370
    %417 = vmatprep.subr.bf16.mxu0 %v374
    %418 = vmatpush1.bf16.msra.mxu0 %v373
    %419 = vmatprep.subr.bf16.mxu0 %v377
    %420 = vmatpush1.bf16.msra.mxu0 %v376
    %421 = vmatprep.subr.bf16.mxu0 %v380
    %422 = vmatpush1.bf16.msra.mxu0 %v379
    %423 = vmatprep.subr.bf16.mxu0 %v383
    %424 = vmatpush1.bf16.msra.mxu0 %v382
    %425 = vmatprep.subr.bf16.mxu0 0
    %426 = vmatpush1.bf16.msra.mxu0 0
    %427 = vmatprep.subr.bf16.mxu0 0
    %428 = vmatpush1.bf16.msra.mxu0 0
    %429 = vmatprep.subr.bf16.mxu0 0
    %430 = vmatpush1.bf16.msra.mxu0 0
    %431 = vmatprep.subr.bf16.mxu0 0
    %432 = vmatpush1.bf16.msra.mxu0 0
    %433 = vmatprep.subr.bf16.mxu0 0
    %434 = vmatpush1.bf16.msra.mxu0 0
    %435 = vmatprep.subr.bf16.mxu0 0
    %436 = vmatpush1.bf16.msra.mxu0 0
    %437 = vmatprep.subr.bf16.mxu0 0
    %438 = vmatpush1.bf16.msra.mxu0 0
    %439 = vmatprep.subr.bf16.mxu0 0
    %440 = vmatpush1.bf16.msra.mxu0 0
    %441 = vmatprep.mubr.bf16.mxu0 0
    %442 = vmatmul.mubr.bf16.gmra.mrb[0].mxu0 %v231
    %v443 = vpop.f32.mrb[0].mxu0
    %v444 = vadd.f32 %v269, %v443
    %v445 = vpop.f32.mrb[0].mxu0
    %v446 = vadd.f32 %v273, %v445
    %v447 = vpop.f32.mrb[0].mxu0
    %v448 = vadd.f32 %v269, %v447
    %v449 = vpop.f32.mrb[0].mxu0
    %v450 = vadd.f32 %v273, %v449
    %451 = vdwg.mxu0
    %452 = vmatprep.subr.bf16.mxu0 0
    %453 = vmatpush1.bf16.msra.mxu0 %v363
    %454 = vmatprep.subr.bf16.mxu0 0
    %455 = vmatpush1.bf16.msra.mxu0 %v366
    %456 = vmatprep.subr.bf16.mxu0 0
    %457 = vmatpush1.bf16.msra.mxu0 %v369
    %458 = vmatprep.subr.bf16.mxu0 0
    %459 = vmatpush1.bf16.msra.mxu0 %v372
    %460 = vmatprep.subr.bf16.mxu0 0
    %461 = vmatpush1.bf16.msra.mxu0 %v375
    %462 = vmatprep.subr.bf16.mxu0 0
    %463 = vmatpush1.bf16.msra.mxu0 %v378
    %464 = vmatprep.subr.bf16.mxu0 0
    %465 = vmatpush1.bf16.msra.mxu0 %v381
    %466 = vmatprep.subr.bf16.mxu0 0
    %467 = vmatpush1.bf16.msra.mxu0 %v384
    %468 = vmatprep.subr.bf16.mxu0 0
    %469 = vmatpush1.bf16.msra.mxu0 0
    %470 = vmatprep.subr.bf16.mxu0 0
    %471 = vmatpush1.bf16.msra.mxu0 0
    %472 = vmatprep.subr.bf16.mxu0 0
    %473 = vmatpush1.bf16.msra.mxu0 0
    %474 = vmatprep.subr.bf16.mxu0 0
    %475 = vmatpush1.bf16.msra.mxu0 0
    %476 = vmatprep.subr.bf16.mxu0 0
    %477 = vmatpush1.bf16.msra.mxu0 0
    %478 = vmatprep.subr.bf16.mxu0 0
    %479 = vmatpush1.bf16.msra.mxu0 0
    %480 = vmatprep.subr.bf16.mxu0 0
    %481 = vmatpush1.bf16.msra.mxu0 0
    %482 = vmatprep.subr.bf16.mxu0 0
    %483 = vmatpush1.bf16.msra.mxu0 0
    %484 = vmatprep.mubr.bf16.mxu0 0
    %485 = vmatmul.mubr.bf16.gmra.mrb[0].mxu0 %v231
    %v486 = vpop.f32.mrb[0].mxu0
    %v487 = vadd.f32 %v277, %v486
    %v488 = vpop.f32.mrb[0].mxu0
    %v489 = vpop.f32.mrb[0].mxu0
    %v490 = vadd.f32 %v277, %v489
    %v491 = vpop.f32.mrb[0].mxu0
    %492 = vdwg.mxu0
    %v493 = vmax.f32 %v444, 0.0
    %v494 = vmax.f32 %v448, 0.0
    %v495 = vand.u32 2147483647, %v444
    %v496 = vand.u32 2147483647, %v448
    %v497 = vsub.f32 0.0, %v495
    %v498 = vsub.f32 0.0, %v496
    %v499 = vmul.f32 %v497, 1.442695
    %v500 = vpow.pop %v499
    %v501 = vmul.f32 %v498, 1.442695
    %v502 = vpow.pop %v501
    %v503 = vadd.f32 %v500, 1.0
    %v504 = vlog2.pop %v503
    %v505 = vmul.f32 %v504, 0.6931472
    %v506 = vmul.f32 -0.5, %v500
    %v507 = vadd.f32 %v506, 1.0
    %v508 = vmul.f32 %v507, %v500
    %v509 = vand.u32 2147483647, %v500
    %vm510 = vcmp.lt.f32.partialorder %v509, 0.0004427343
    %v511 = vsel %vm510, %v508, %v505
    %v512 = vadd.f32 %v502, 1.0
    %v513 = vlog2.pop %v512
    %v514 = vmul.f32 %v513, 0.6931472
    %v515 = vmul.f32 -0.5, %v502
    %v516 = vadd.f32 %v515, 1.0
    %v517 = vmul.f32 %v516, %v502
    %v518 = vand.u32 2147483647, %v502
    %vm519 = vcmp.lt.f32.partialorder %v518, 0.0004427343
    %v520 = vsel %vm519, %v517, %v514
    %v521 = vadd.f32 %v493, %v511
    %v522 = vadd.f32 %v494, %v520
    %v523 = vmul.f32 %v521, -0.92103404
    %v524 = vmul.f32 %v522, -0.92103404
    %v525 = vmul.f32 %v523, 1.442695
    %v526 = vpow.pop %v525
    %v527 = vmul.f32 %v524, 1.442695
    %v528 = vpow.pop %v527
    %v529 = vmax.f32 %v446, 0.0
    %v530 = vmax.f32 %v450, 0.0
    %v531 = vand.u32 2147483647, %v446
    %v532 = vand.u32 2147483647, %v450
    %v533 = vsub.f32 0.0, %v531
    %v534 = vsub.f32 0.0, %v532
    %v535 = vmul.f32 %v533, 1.442695
    %v536 = vpow.pop %v535
    %v537 = vmul.f32 %v534, 1.442695
    %v538 = vpow.pop %v537
    %v539 = vadd.f32 %v536, 1.0
    %v540 = vlog2.pop %v539
    %v541 = vmul.f32 %v540, 0.6931472
    %v542 = vmul.f32 -0.5, %v536
    %v543 = vadd.f32 %v542, 1.0
    %v544 = vmul.f32 %v543, %v536
    %v545 = vand.u32 2147483647, %v536
    %vm546 = vcmp.lt.f32.partialorder %v545, 0.0004427343
    %v547 = vsel %vm546, %v544, %v541
    %v548 = vadd.f32 %v538, 1.0
    %v549 = vlog2.pop %v548
    %v550 = vmul.f32 %v549, 0.6931472
    %v551 = vmul.f32 -0.5, %v538
    %v552 = vadd.f32 %v551, 1.0
    %v553 = vmul.f32 %v552, %v538
    %v554 = vand.u32 2147483647, %v538
    %vm555 = vcmp.lt.f32.partialorder %v554, 0.0004427343
    %v556 = vsel %vm555, %v553, %v550
    %v557 = vadd.f32 %v529, %v547
    %v558 = vadd.f32 %v530, %v556
    %v559 = vmul.f32 %v557, -0.92103404
    %v560 = vmul.f32 %v558, -0.92103404
    %v561 = vmul.f32 %v559, 1.442695
    %v562 = vpow.pop %v561
    %v563 = vmul.f32 %v560, 1.442695
    %v564 = vpow.pop %v563
    %v565 = vsub.f32 1.0, %v57
    %v566 = vsub.f32 1.0, %v58
    %568 = vset.pattern.permute.xlu0 1
    %569 = vperm.xlu0 %568, %v565
    %v570 = vpop.permute.xlu0 %569
    %573 = vset.pattern.permute.xlu0 1
    %574 = vperm.xlu0 %573, %v566
    %v575 = vpop.permute.xlu0 %574
    %v577 = vmul.f32 %v570, %v526
    %v578 = vmul.f32 %v575, %v528
    %v579 = vmul.f32 %v577, %v153
    %v580 = vmul.f32 %v578, %v158
    %582 = vset.pattern.permute.xlu0 1
    %583 = vperm.xlu0 %582, %v57
    %v584 = vpop.permute.xlu0 %583
    %587 = vset.pattern.permute.xlu0 1
    %588 = vperm.xlu0 %587, %v58
    %v589 = vpop.permute.xlu0 %588
    %v591 = vmul.f32 %v584, %v562
    %v592 = vmul.f32 %v589, %v564
    %v593 = vmul.f32 %v591, %v163
    %v594 = vmul.f32 %v592, %v168
    %v595 = vadd.f32 %v579, %v593
    %v596 = vadd.f32 %v580, %v594
    %597 = vmax.xlane.f32.xlu0 %v487
    %v598 = vpop.xlane.xlu0 %597
    %599 = vmax.xlane.f32.xlu0 %v490
    %v600 = vpop.xlane.xlu0 %599
    %v601 = vsub.f32 %v487, %v598
    %v602 = vsub.f32 %v490, %v600
    %v603 = vmul.f32 %v601, 1.442695
    %v604 = vpow.pop %v603
    %v605 = vmul.f32 %v602, 1.442695
    %v606 = vpow.pop %v605
    %607 = vadd.xlane.f32.xlu0 %v604
    %v608 = vpop.xlane.xlu0 %607
    %609 = vadd.xlane.f32.xlu0 %v606
    %v610 = vpop.xlane.xlu0 %609
    %v611 = vrcp.pop %v608
    %v612 = vmul.f32 %v604, %v611
    %v613 = vrcp.pop %v610
    %v614 = vmul.f32 %v606, %v613
    %v615 = vld [vmem:[%s7] sm:$0x1]
    %v617 = vlaneseq
    %v618 = vshrl.u32 %v617, 7
    %v619 = vsub.s32 0, %v618
    %v620 = vrot.slane %v615, %v619
    %v622 = vmul.f32 %v229, %v620
    %v623 = vmul.f32 %v230, %v620
    %624 = vadd.xlane.f32.xlu0 %v622
    %v625 = vpop.xlane.xlu0 %624
    %626 = vadd.xlane.f32.xlu0 %v623
    %v627 = vpop.xlane.xlu0 %626
    %v628 = vld [vmem:[#allocation2] sm:$0x1]
    %v630 = vlaneseq
    %v631 = vshrl.u32 %v630, 7
    %v632 = vsub.s32 0, %v631
    %v633 = vrot.slane %v628, %v632
    %v635 = vadd.f32 %v625, %v633
    %v636 = vadd.f32 %v627, %v633
    %v637 = vsub.f32 0.0, %v635
    %v638 = vsub.f32 0.0, %v636
    %v639 = vmul.f32 %v637, 1.442695
    %v640 = vpow.pop %v639
    %v641 = vmul.f32 %v638, 1.442695
    %v642 = vpow.pop %v641
    %v643 = vadd.f32 %v640, 1.0
    %v644 = vadd.f32 %v642, 1.0
    %v645 = vrcp.pop %v643
    %v646 = vmul.f32 1.0, %v645
    %v647 = vrcp.pop %v644
    %v648 = vmul.f32 1.0, %v647
    %650 = vset.pattern.permute.xlu0 0
    %651 = vperm.xlu0 %650, %v646
    %v652 = vpop.permute.xlu0 %651
    %655 = vset.pattern.permute.xlu0 0
    %656 = vperm.xlu0 %655, %v648
    %v657 = vpop.permute.xlu0 %656
    %v659 = vmul.f32 %v652, %v612
    %v660 = vmul.f32 %v657, %v614
    %v661 = vadd.f32 %v595, %v659
    %v662 = vadd.f32 %v596, %v660
    %664 = vset.pattern.permute.xlu0 2
    %665 = vperm.xlu0 %664, %v62
    %v666 = vpop.permute.xlu0 %665
    %669 = vset.pattern.permute.xlu0 2
    %670 = vperm.xlu0 %669, %v64
    %v671 = vpop.permute.xlu0 %670
    %v673 = vmul.f32 %v666, %v661
    %v674 = vmul.f32 %v671, %v662
    %v675 = vld [vmem:[%s9] sm:$0x1]
    %v677 = vlaneseq
    %v678 = vshrl.u32 %v677, 7
    %v679 = vsub.s32 0, %v678
    %v680 = vrot.slane %v675, %v679
    %v682 = vmul.f32 %v673, %v680
    %v683 = vmul.f32 %v674, %v680
    %684 = vst [vmem:[#allocation6] sm:$0xff] %v682
    %685 = vst [vmem:[#allocation6 + $0x8] sm:$0xff] %v683
    // Predicated region
    $region46: #{multiwavelength_sed.1} parent=1 // pred_check
      _
    $region47: #{multiwavelength_sed.1} parent=1 // pred_check_branch
      %687 = sbr.rel (0) target = $region49
    $region48: #{multiwavelength_sed.1} parent=1 // pred_region
      %s689 = ssub.s32 256, 256
      %690 = vsyncadd [#allocation5], %s689
      %s691 = sshll.u32 [#allocation6], 4
      %s692 = int_to_ptr.vmem [resolvable:$true] %s691
      %697 = dma.vmem_to_hbm [thread:$0]  %s692, 256, %s10, [#allocation5], 128, 128, 8
    $region49: #{multiwavelength_sed.1} parent=1 // pred_fallthru
      _
    // Predicated region
    $region50: #{multiwavelength_sed.1} parent=1 // pred_check
      _
    $region51: #{multiwavelength_sed.1} parent=1 // pred_check_branch
      %699 = sbr.rel (0) target = $region53
    $region52: #{multiwavelength_sed.1} parent=1 // pred_region
      %700 = dma.done [#allocation5], 256
    $region53: #{multiwavelength_sed.1} parent=1 // pred_fallthru
      _
    %701 = vsyncpa [#allocation4], 1
    %702 = vsyncpa [#allocation5], 1

</llo_original>
